<compile_context>
chip_gen: v7x
topology: tpu7x:2x2x1
jax: 0.10.0
libtpu: 0.0.40
codegen_flags: <defaults>
</compile_context>

<pallas_src>
import functools
import math

import jax
import jax.numpy as jnp
from jax.experimental import pallas as pl
from jax.experimental.pallas import tpu as pltpu


def _is_small_int(g):
    g = float(g)
    return 0.0 <= g <= 16.0 and g == int(g)


def _int_pow(v, p):
    """v**p for a small non-negative Python int p using multiplies only (no EUP)."""
    p = int(p)
    if p == 0:
        return jnp.ones_like(v)
    result = None
    acc = v
    while p:
        if p & 1:
            result = acc if result is None else result * acc
        p >>= 1
        if p:
            acc = acc * acc
    return result


def _loss_kernel(x_ref, t_ref, asym_ref, focal_ref, *,
                 gamma_pos, gamma_neg, clip, focal_gamma, eps,
                 n_valid, tile_n, needs_mask):
    i = pl.program_id(0)

    x = x_ref[...].astype(jnp.float32)
    t = t_ref[...].astype(jnp.float32)
    # TODO(synk): select-based fast path assumes hard 0/1 multi-label targets; soft
    # (fractional) targets would need the mul-add-blend / general pow semantics.
    pos = t >= 0.5

    # ---- shared sigmoid / log-sigmoid pieces (exp + log1p + approx-recip on EUP) ---
    e = jnp.exp(-jnp.abs(x))                          # exp(-|x|)
    softplus = jnp.log1p(e)                           # log(1 + exp(-|x|)), stable
    inv = pl.reciprocal(1.0 + e, approx=True)         # 1 / (1 + exp(-|x|))
    xs_pos = jnp.where(x >= 0.0, inv, e * inv)        # sigmoid(x), exact both signs
    xs_neg_raw = 1.0 - xs_pos                         # 1 - sigmoid(x)

    # ---- AsymmetricLossMultiLabel (sum over all elements; negation in epilogue) ----
    # log(max(sigmoid(x), eps)) == max(log_sigmoid(x), log(eps)); log_sigmoid exact.
    log_pos = jnp.maximum(jnp.minimum(x, 0.0) - softplus, math.log(eps))
    xs_neg = jnp.minimum(xs_neg_raw + clip, 1.0)      # asymmetric clipping, clamp<=1
    log_neg = jnp.log(jnp.maximum(xs_neg, eps))
    ce = jnp.where(pos, log_pos, log_neg)             # single select, binary targets
    base = jnp.where(pos, xs_neg_raw, 1.0 - xs_neg)   # 1 - pt
    if _is_small_int(gamma_pos) and _is_small_int(gamma_neg):
        w = jnp.where(pos, _int_pow(base, gamma_pos), _int_pow(base, gamma_neg))
    else:
        gamma = jnp.where(pos, jnp.float32(gamma_pos), jnp.float32(gamma_neg))
        w = jnp.exp(gamma * jnp.log(jnp.maximum(base, 1e-30)))
        w = jnp.where(base > 0.0, w, 0.0)
    asym_elem = ce * w                                # sign flipped outside kernel

    # ---- Focal loss on BCE-with-logits (alpha and 1/(N*C) folded outside) ----------
    # TODO(synk): pos_weight (self.class_weights) only applies in training mode and
    # defaults to None; eval / class_weights=None semantics implemented here.
    bce = jnp.maximum(jnp.where(pos, -x, x), 0.0) + softplus  # stable BCE-with-logits
    # exp(-bce) == sigmoid(x)^t * (1-sigmoid(x))^(1-t) for binary t -> reuse, no exp.
    p_true = jnp.where(pos, xs_pos, xs_neg_raw)
    pt_f = jnp.minimum(p_true, math.exp(-1e-6))       # == exp(-max(bce, 1e-6))
    m = 1.0 - pt_f
    if _is_small_int(focal_gamma):
        focal_mod = _int_pow(m, focal_gamma)
    else:
        focal_mod = jnp.exp(focal_gamma * jnp.log(jnp.maximum(m, 1e-30)))
    focal_elem = focal_mod * bce

    def reduce_and_store(a_elem, f_elem):
        # Sublane reduce to one lane-dense (1, C) partial row per grid step; the
        # tiny cross-tile / cross-lane reduction happens outside the pallas_call.
        asym_ref[...] = jnp.sum(a_elem, axis=0, keepdims=True)
        focal_ref[...] = jnp.sum(f_elem, axis=0, keepdims=True)

    if needs_mask:
        last = pl.num_programs(0) - 1

        @pl.when(i != last)
        def _():
            reduce_and_store(asym_elem, focal_elem)

        @pl.when(i == last)
        def _():
            # Only the final tile contains rows beyond N; select (not multiply) so
            # garbage/NaN in the out-of-bounds region is discarded before the sum.
            rows = jax.lax.broadcasted_iota(jnp.int32, x.shape, 0) + i * tile_n
            valid = rows < n_valid
            reduce_and_store(jnp.where(valid, asym_elem, 0.0),
                             jnp.where(valid, focal_elem, 0.0))
    else:
        reduce_and_store(asym_elem, focal_elem)


def _vmem_capacity_bytes():
    try:
        info = pltpu.get_tpu_info()
        cap = getattr(info, "vmem_capacity_bytes", None)
        if cap:
            return int(cap)
    except Exception:
        pass
    return 64 * 1024 * 1024   # conservative fallback: v7x physical VMEM per core


def focal_asymmetric_loss(inputs, targets, *,
                          gamma_pos=1.0, gamma_neg=4.0, clip=0.05,
                          alpha=0.25, focal_weight=0.5, focal_gamma=2.0,
                          eps=1e-8, max_tile_n=4096, vmem_limit_bytes=None):
    """Pallas implementation of FocalAsymmetricLoss.forward (eval semantics)."""
    assert inputs.shape == targets.shape and inputs.ndim == 2
    n, c = inputs.shape

    def round_up(v, m):
        return ((v + m - 1) // m) * m

    # Per-generation VMEM budget (v7x: 64 MiB physical; v5e/v6e: 128 MiB).
    vmem_cap = _vmem_capacity_bytes()
    if vmem_limit_bytes is None:
        vmem_limit_bytes = max(32 * 1024 * 1024, min(3 * vmem_cap // 4, 96 * 1024 * 1024))
    live_budget = vmem_limit_bytes // 2

    # Row-tile sizing: full-C blocks.  Per-row live bytes = 2 pipeline buffers per
    # input + ~10 live f32 elementwise temporaries inside the kernel.  Also target
    # ~2 MiB per input block so the ~0.35us per-grid-step overhead is amortized.
    x_b = inputs.dtype.itemsize
    t_b = targets.dtype.itemsize
    bytes_per_row_live = 2 * c * (x_b + t_b) + 10 * c * 4
    rows_by_vmem = max(8, ((live_budget // bytes_per_row_live) // 8) * 8)
    rows_by_target = max(8, (((2 * 1024 * 1024) // (c * 4)) // 8) * 8)
    tile_n = min(round_up(n, 8), round_up(max_tile_n, 8), rows_by_vmem, rows_by_target)
    num_tiles = (n + tile_n - 1) // tile_n
    needs_mask = (num_tiles * tile_n) != n

    # TODO(synk): for very large C (tens of thousands of classes) add a second grid
    # axis over C in multiples of 128 instead of shrinking tile_n.
    kernel = functools.partial(
        _loss_kernel,
        gamma_pos=float(gamma_pos), gamma_neg=float(gamma_neg), clip=float(clip),
        focal_gamma=float(focal_gamma), eps=float(eps),
        n_valid=n, tile_n=tile_n, needs_mask=needs_mask)

    asym_part, focal_part = pl.pallas_call(
        kernel,
        out_shape=(jax.ShapeDtypeStruct((num_tiles, c), jnp.float32),
                   jax.ShapeDtypeStruct((num_tiles, c), jnp.float32)),
        grid_spec=pltpu.PrefetchScalarGridSpec(
            num_scalar_prefetch=0,
            grid=(num_tiles,),
            in_specs=[
                pl.BlockSpec((tile_n, c), lambda i: (i, 0)),
                pl.BlockSpec((tile_n, c), lambda i: (i, 0)),
            ],
            out_specs=[
                pl.BlockSpec((1, c), lambda i: (i, 0)),
                pl.BlockSpec((1, c), lambda i: (i, 0)),
            ],
        ),
        # Independent per-tile partial outputs -> "parallel": Mosaic may shard the
        # row loop across both TensorCores on v7x; no effect on v5e/v6e (1 TC).
        compiler_params=pltpu.CompilerParams(
            dimension_semantics=("parallel",),
            vmem_limit_bytes=int(vmem_limit_bytes)),
    )(inputs, targets)

    # Epilogue (tiny arrays): cross-tile/cross-lane reduce, sign, alpha, mean, blend.
    asym = -jnp.sum(asym_part, dtype=jnp.float32)
    focal = jnp.float32(alpha / float(n * c)) * jnp.sum(focal_part, dtype=jnp.float32)
    return jnp.float32(1.0 - focal_weight) * asym + jnp.float32(focal_weight) * focal


def _reference_loss(x, t, *, gamma_pos=1.0, gamma_neg=4.0, clip=0.05,
                    alpha=0.25, focal_weight=0.5, focal_gamma=2.0, eps=1e-8):
    """Pure-JAX reference mirroring the PyTorch module (eval mode)."""
    x = x.astype(jnp.float32)
    t = t.astype(jnp.float32)
    xs_pos = jax.nn.sigmoid(x)
    xs_neg = jnp.minimum(1.0 - xs_pos + clip, 1.0)
    ce = t * jnp.log(jnp.maximum(xs_pos, eps)) + (1.0 - t) * jnp.log(jnp.maximum(xs_neg, eps))
    pt = xs_pos * t + xs_neg * (1.0 - t)
    gamma = gamma_pos * t + gamma_neg * (1.0 - t)
    w = jnp.power(1.0 - pt, gamma)
    asym = -jnp.sum(ce * w)

    bce = jnp.maximum(x, 0.0) - x * t + jnp.log1p(jnp.exp(-jnp.abs(x)))
    pt_f = jnp.exp(-jnp.maximum(bce, 1e-6))
    focal = jnp.mean(alpha * (1.0 - pt_f) ** focal_gamma * bce)
    return (1.0 - focal_weight) * asym + focal_weight * focal


if __name__ == "__main__":
    key = jax.random.PRNGKey(0)
    k_logits, k_targets = jax.random.split(key)

    # (batch, num_classes) multi-label problem.
    N, C = 16, 128
    logits = jax.random.normal(k_logits, (N, C), dtype=jnp.float32) * 2.0
    targets = (jax.random.uniform(k_targets, (N, C)) < 0.3).astype(jnp.float32)

    out = jax.block_until_ready(focal_asymmetric_loss(logits, targets))
    ref = _reference_loss(logits, targets)
    # approx-reciprocal sigmoid (~2^-12 rel. error) -> slightly looser tolerance.
    assert jnp.allclose(out, ref, rtol=2e-3, atol=1e-3), (out, ref)

    # Multi-tile + ragged last-block (masked) path, with bf16 targets (binary exact).
    N2 = 20
    logits2 = jax.random.normal(k_logits, (N2, C), dtype=jnp.float32) * 2.0
    targets2_f32 = (jax.random.uniform(k_targets, (N2, C)) < 0.3).astype(jnp.float32)
    out2 = jax.block_until_ready(
        focal_asymmetric_loss(logits2, targets2_f32.astype(jnp.bfloat16), max_tile_n=8))
    ref2 = _reference_loss(logits2, targets2_f32)
    assert jnp.allclose(out2, ref2, rtol=2e-3, atol=1e-3), (out2, ref2)

    print("KERNEL_OK")
</pallas_src>

<mosaic_0001>
module attributes {stable_mosaic.version = 11 : i64} {
  func.func @_loss_kernel(%arg0: i32, %arg1: memref<16x128xf32, #tpu.memory_space<vmem>>, %arg2: memref<16x128xf32, #tpu.memory_space<vmem>>, %arg3: memref<1x128xf32, #tpu.memory_space<vmem>>, %arg4: memref<1x128xf32, #tpu.memory_space<vmem>>) attributes {dimension_semantics = [#tpu.dimension_semantics<parallel>], iteration_bounds = array<i64: 1>, scalar_prefetch = 0 : i64, scratch_operands = 0 : i64, tpu.core_type = #tpu.core_type<tc>, window_params = [{transform_indices = @transform_0, window_bounds = array<i64: 16, 128>}, {transform_indices = @transform_1, window_bounds = array<i64: 16, 128>}, {transform_indices = @transform_2, window_bounds = array<i64: 1, 128>}, {transform_indices = @transform_3, window_bounds = array<i64: 1, 128>}]} {
    %c0 = arith.constant 0 : index
    %c0_0 = arith.constant 0 : index
    %0 = vector.load %arg1[%c0, %c0_0] : memref<16x128xf32, #tpu.memory_space<vmem>>, vector<16x128xf32>
    %c0_1 = arith.constant 0 : index
    %c0_2 = arith.constant 0 : index
    %1 = vector.load %arg2[%c0_1, %c0_2] : memref<16x128xf32, #tpu.memory_space<vmem>>, vector<16x128xf32>
    %cst = arith.constant 5.000000e-01 : f32
    %2 = vector.broadcast %cst : f32 to vector<16x128xf32>
    %3 = arith.cmpf oge, %1, %2 : vector<16x128xf32>
    %4 = math.absf %0 : vector<16x128xf32>
    %cst_3 = arith.constant 0.000000e+00 : f32
    %5 = vector.broadcast %cst_3 : f32 to vector<16x128xf32>
    %6 = arith.subf %5, %4 : vector<16x128xf32>
    %7 = math.exp %6 : vector<16x128xf32>
    %8 = math.log1p %7 : vector<16x128xf32>
    %cst_4 = arith.constant 1.000000e+00 : f32
    %9 = vector.broadcast %cst_4 : f32 to vector<16x128xf32>
    %10 = arith.addf %9, %7 : vector<16x128xf32>
    %11 = tpu.reciprocal %10 {approx = true} : vector<16x128xf32> -> vector<16x128xf32>
    %cst_5 = arith.constant 0.000000e+00 : f32
    %12 = vector.broadcast %cst_5 : f32 to vector<16x128xf32>
    %13 = arith.cmpf oge, %0, %12 : vector<16x128xf32>
    %14 = arith.mulf %7, %11 : vector<16x128xf32>
    %15 = arith.select %13, %11, %14 : vector<16x128xi1>, vector<16x128xf32>
    %cst_6 = arith.constant 1.000000e+00 : f32
    %16 = vector.broadcast %cst_6 : f32 to vector<16x128xf32>
    %17 = arith.subf %16, %15 : vector<16x128xf32>
    %cst_7 = arith.constant 0.000000e+00 : f32
    %18 = vector.broadcast %cst_7 : f32 to vector<16x128xf32>
    %19 = arith.minimumf %0, %18 : vector<16x128xf32>
    %20 = arith.subf %19, %8 : vector<16x128xf32>
    %cst_8 = arith.constant -18.420681 : f32
    %21 = vector.broadcast %cst_8 : f32 to vector<16x128xf32>
    %22 = arith.maximumf %20, %21 : vector<16x128xf32>
    %cst_9 = arith.constant 5.000000e-02 : f32
    %23 = vector.broadcast %cst_9 : f32 to vector<16x128xf32>
    %24 = arith.addf %17, %23 : vector<16x128xf32>
    %cst_10 = arith.constant 1.000000e+00 : f32
    %25 = vector.broadcast %cst_10 : f32 to vector<16x128xf32>
    %26 = arith.minimumf %24, %25 : vector<16x128xf32>
    %cst_11 = arith.constant 9.99999993E-9 : f32
    %27 = vector.broadcast %cst_11 : f32 to vector<16x128xf32>
    %28 = arith.maximumf %26, %27 : vector<16x128xf32>
    %29 = math.log %28 : vector<16x128xf32>
    %30 = arith.select %3, %22, %29 : vector<16x128xi1>, vector<16x128xf32>
    %cst_12 = arith.constant 1.000000e+00 : f32
    %31 = vector.broadcast %cst_12 : f32 to vector<16x128xf32>
    %32 = arith.subf %31, %26 : vector<16x128xf32>
    %33 = arith.select %3, %17, %32 : vector<16x128xi1>, vector<16x128xf32>
    %34 = arith.mulf %33, %33 : vector<16x128xf32>
    %35 = arith.mulf %34, %34 : vector<16x128xf32>
    %36 = arith.select %3, %33, %35 : vector<16x128xi1>, vector<16x128xf32>
    %37 = arith.mulf %30, %36 : vector<16x128xf32>
    %cst_13 = arith.constant 0.000000e+00 : f32
    %38 = vector.broadcast %cst_13 : f32 to vector<16x128xf32>
    %39 = arith.subf %38, %0 : vector<16x128xf32>
    %40 = arith.select %3, %39, %0 : vector<16x128xi1>, vector<16x128xf32>
    %cst_14 = arith.constant 0.000000e+00 : f32
    %41 = vector.broadcast %cst_14 : f32 to vector<16x128xf32>
    %42 = arith.maximumf %40, %41 : vector<16x128xf32>
    %43 = arith.addf %42, %8 : vector<16x128xf32>
    %44 = arith.select %3, %15, %17 : vector<16x128xi1>, vector<16x128xf32>
    %cst_15 = arith.constant 0.999998986 : f32
    %45 = vector.broadcast %cst_15 : f32 to vector<16x128xf32>
    %46 = arith.minimumf %44, %45 : vector<16x128xf32>
    %cst_16 = arith.constant 1.000000e+00 : f32
    %47 = vector.broadcast %cst_16 : f32 to vector<16x128xf32>
    %48 = arith.subf %47, %46 : vector<16x128xf32>
    %49 = arith.mulf %48, %48 : vector<16x128xf32>
    %50 = arith.mulf %49, %43 : vector<16x128xf32>
    %cst_17 = arith.constant dense<0.000000e+00> : vector<128xf32>
    %51 = vector.multi_reduction <add>, %37, %cst_17 [0] : vector<16x128xf32> to vector<128xf32>
    %52 = vector.shape_cast %51 : vector<128xf32> to vector<1x128xf32>
    %c0_18 = arith.constant 0 : index
    %c0_19 = arith.constant 0 : index
    %53 = vector.load %arg3[%c0_18, %c0_19] : memref<1x128xf32, #tpu.memory_space<vmem>>, vector<1x128xf32>
    tpu.vector_store %arg3[%c0_18, %c0_19], %52 {strides = array<i32>} : memref<1x128xf32, #tpu.memory_space<vmem>>, vector<1x128xf32>,
    %cst_20 = arith.constant dense<0.000000e+00> : vector<128xf32>
    %54 = vector.multi_reduction <add>, %50, %cst_20 [0] : vector<16x128xf32> to vector<128xf32>
    %55 = vector.shape_cast %54 : vector<128xf32> to vector<1x128xf32>
    %c0_21 = arith.constant 0 : index
    %c0_22 = arith.constant 0 : index
    %56 = vector.load %arg4[%c0_21, %c0_22] : memref<1x128xf32, #tpu.memory_space<vmem>>, vector<1x128xf32>
    tpu.vector_store %arg4[%c0_21, %c0_22], %55 {strides = array<i32>} : memref<1x128xf32, #tpu.memory_space<vmem>>, vector<1x128xf32>,
    return
  }
  func.func @transform_0(%arg0: i32) -> (i32, i32) {
    %c0_i32 = arith.constant 0 : i32
    %c0_i32_0 = arith.constant 0 : i32
    return %arg0, %c0_i32 : i32, i32
  }
  func.func @transform_1(%arg0: i32) -> (i32, i32) {
    %c0_i32 = arith.constant 0 : i32
    %c0_i32_0 = arith.constant 0 : i32
    return %arg0, %c0_i32 : i32, i32
  }
  func.func @transform_2(%arg0: i32) -> (i32, i32) {
    %c0_i32 = arith.constant 0 : i32
    %c0_i32_0 = arith.constant 0 : i32
    return %arg0, %c0_i32 : i32, i32
  }
  func.func @transform_3(%arg0: i32) -> (i32, i32) {
    %c0_i32 = arith.constant 0 : i32
    %c0_i32_0 = arith.constant 0 : i32
    return %arg0, %c0_i32 : i32, i32
  }
}

</mosaic_0001>

<llo_original>
// kernel: tpu_custom_call.1
$region0: #{tpu_custom_call.1}
  #allocation0 [shape = 'u32[]', space=smem, size = 0x4, offset = 0x4, fixed_abs, tag = 'smem constant byte address 0x4 - core index']
  #allocation1 [shape = 'u32[144,128]{1,0:T(1,128)}', space=vmem, size = 0x12000, scoped, tag = 'internal scratch']
  %s0 = inlined_call_operand.hbm [shape: f32[16,128], index: 0, kind: input, shape index: {}]
  %s1 = inlined_call_operand.hbm [shape: f32[16,128], index: 1, kind: input, shape index: {}]
  %s2 = inlined_call_operand.hbm [shape: f32[1,128], index: 2, kind: output, shape index: {0}]
  %s3 = inlined_call_operand.hbm [shape: f32[1,128], index: 3, kind: output, shape index: {1}]
  %4 = xla_tuple %s2, %s3
  %s5 = sld [smem:[#allocation0]]
  $region34: #{tpu_custom_call.1} parent=0
    _
  %s7 = ssub.s32 1, %s5
  %s8 = scalar_select 0, %s7, %s5
  $region1: #{tpu_custom_call.1} parent=0
    #allocation2 [shape = 'u8[8192]{0}', space=vmem, size = 0x2000, scoped, tag = 'input window, operand 0, single buffered']
    #allocation3 [shape = 's32[1]{0}', space=sflag, size = 0x4, scoped, tag = 'scoped memory for tpu_custom_call.1']
    #allocation4 [shape = 's32[1]{0}', space=sflag, size = 0x4, scoped, tag = 'scoped memory for tpu_custom_call.1']
    #allocation5 [shape = 'u8[8192]{0}', space=vmem, size = 0x2000, scoped, tag = 'input window, operand 1, single buffered']
    #allocation6 [shape = 's32[1]{0}', space=sflag, size = 0x4, scoped, tag = 'scoped memory for tpu_custom_call.1']
    #allocation7 [shape = 'u8[512]{0}', space=vmem, size = 0x400, scoped, tag = 'output window, operand 0, single buffered']
    #allocation8 [shape = 'u8[512]{0}', space=vmem, size = 0x400, scoped, tag = 'output window, operand 1, single buffered']
    #allocation9 [shape = 's32[1]{0}', space=sflag, size = 0x4, scoped, tag = 'scoped memory for tpu_custom_call.1']
    %9 = vsyncpa [#allocation3], 0
    %10 = vsyncpa [#allocation6], 0
    %11 = vsyncpa [#allocation4], 0
    %12 = vsyncpa [#allocation9], 0
    // Predicated region
    $region2: #{tpu_custom_call.1} parent=1 // pred_check
      _
    $region3: #{tpu_custom_call.1} parent=1 // pred_check_branch
      %14 = sbr.rel (0) target = $region5
    $region4: #{tpu_custom_call.1} parent=1 // pred_region
      %s16 = ssub.s32 256, 256
      %17 = vsyncadd [#allocation3], %s16
      %s18 = sshll.u32 [#allocation2], 4
      %s19 = int_to_ptr.vmem [resolvable:$true] %s18
      %24 = dma.hbm_to_vmem [thread:$0]  %s0, 256, %s19, [#allocation3], 128, 128, 8
    $region5: #{tpu_custom_call.1} parent=1 // pred_fallthru
      _
    // Predicated region
    $region6: #{tpu_custom_call.1} parent=1 // pred_check
      _
    $region7: #{tpu_custom_call.1} parent=1 // pred_check_branch
      %26 = sbr.rel (0) target = $region9
    $region8: #{tpu_custom_call.1} parent=1 // pred_region
      %s28 = ssub.s32 256, 256
      %29 = vsyncadd [#allocation6], %s28
      %s30 = sshll.u32 [#allocation5], 4
      %s31 = int_to_ptr.vmem [resolvable:$true] %s30
      %36 = dma.hbm_to_vmem [thread:$0]  %s1, 256, %s31, [#allocation6], 128, 128, 8
    $region9: #{tpu_custom_call.1} parent=1 // pred_fallthru
      _
    // Predicated region
    $region10: #{tpu_custom_call.1} parent=1 // pred_check
      _
    $region11: #{tpu_custom_call.1} parent=1 // pred_check_branch
      %38 = sbr.rel (0) target = $region13
    $region12: #{tpu_custom_call.1} parent=1 // pred_region
      %39 = dma.done [#allocation3], 256
    $region13: #{tpu_custom_call.1} parent=1 // pred_fallthru
      _
    // Predicated region
    $region14: #{tpu_custom_call.1} parent=1 // pred_check
      _
    $region15: #{tpu_custom_call.1} parent=1 // pred_check_branch
      %41 = sbr.rel (0) target = $region17
    $region16: #{tpu_custom_call.1} parent=1 // pred_region
      %42 = dma.done [#allocation6], 256
    $region17: #{tpu_custom_call.1} parent=1 // pred_fallthru
      _
    %v43 = vld [vmem:[#allocation2] sm:$0xff]
    %v44 = vld [vmem:[#allocation2 + $0x8] sm:$0xff]
    %v45 = vld [vmem:[#allocation5] sm:$0xff]
    %v46 = vld [vmem:[#allocation5 + $0x8] sm:$0xff]
    %vm47 = vcmp.ge.f32.partialorder %v45, 0.5
    %vm48 = vcmp.ge.f32.partialorder %v46, 0.5
    %v49 = vand.u32 2147483647, %v43
    %v50 = vand.u32 2147483647, %v44
    %v51 = vsub.f32 0.0, %v49
    %v52 = vsub.f32 0.0, %v50
    %v53 = vmul.f32 %v51, 1.442695
    %v54 = vpow.pop %v53
    %v55 = vmul.f32 %v52, 1.442695
    %v56 = vpow.pop %v55
    %v57 = vadd.f32 %v54, 1.0
    %v58 = vlog2.pop %v57
    %v59 = vmul.f32 %v58, 0.6931472
    %v60 = vmul.f32 -0.5, %v54
    %v61 = vadd.f32 %v60, 1.0
    %v62 = vmul.f32 %v61, %v54
    %v63 = vand.u32 2147483647, %v54
    %vm64 = vcmp.lt.f32.partialorder %v63, 0.0004427343
    %v65 = vsel %vm64, %v62, %v59
    %v66 = vadd.f32 %v56, 1.0
    %v67 = vlog2.pop %v66
    %v68 = vmul.f32 %v67, 0.6931472
    %v69 = vmul.f32 -0.5, %v56
    %v70 = vadd.f32 %v69, 1.0
    %v71 = vmul.f32 %v70, %v56
    %v72 = vand.u32 2147483647, %v56
    %vm73 = vcmp.lt.f32.partialorder %v72, 0.0004427343
    %v74 = vsel %vm73, %v71, %v68
    %v75 = vadd.f32 %v54, 1.0
    %v76 = vadd.f32 %v56, 1.0
    %v77 = vrcp.pop %v75
    %v78 = vrcp.pop %v76
    %vm79 = vcmp.ge.f32.partialorder %v43, 0.0
    %vm80 = vcmp.ge.f32.partialorder %v44, 0.0
    %v81 = vmul.f32 %v54, %v77
    %v82 = vmul.f32 %v56, %v78
    %v83 = vsel %vm79, %v77, %v81
    %v84 = vsel %vm80, %v78, %v82
    %v85 = vsub.f32 1.0, %v83
    %v86 = vsub.f32 1.0, %v84
    %v87 = vmin.f32 %v43, 0.0
    %v88 = vmin.f32 %v44, 0.0
    %v89 = vsub.f32 %v87, %v65
    %v90 = vsub.f32 %v88, %v74
    %v91 = vmax.f32 %v89, -18.420681
    %v92 = vmax.f32 %v90, -18.420681
    %v93 = vadd.f32 %v85, 0.05
    %v94 = vadd.f32 %v86, 0.05
    %v95 = vmin.f32 %v93, 1.0
    %v96 = vmin.f32 %v94, 1.0
    %v97 = vmax.f32 %v95, 1e-08
    %v98 = vmax.f32 %v96, 1e-08
    %v99 = vlog2.pop %v97
    %v100 = vmul.f32 %v99, 0.6931472
    %v101 = vlog2.pop %v98
    %v102 = vmul.f32 %v101, 0.6931472
    %v103 = vsel %vm47, %v91, %v100
    %v104 = vsel %vm48, %v92, %v102
    %v105 = vsub.f32 1.0, %v95
    %v106 = vsub.f32 1.0, %v96
    %v107 = vsel %vm47, %v85, %v105
    %v108 = vsel %vm48, %v86, %v106
    %v109 = vmul.f32 %v107, %v107
    %v110 = vmul.f32 %v108, %v108
    %v111 = vmul.f32 %v109, %v109
    %v112 = vmul.f32 %v110, %v110
    %v113 = vsel %vm47, %v85, %v111
    %v114 = vsel %vm48, %v86, %v112
    %v115 = vmul.f32 %v103, %v113
    %v116 = vmul.f32 %v104, %v114
    %v117 = vsub.f32 0.0, %v43
    %v118 = vsub.f32 0.0, %v44
    %v119 = vsel %vm47, %v117, %v43
    %v120 = vsel %vm48, %v118, %v44
    %v121 = vmax.f32 %v119, 0.0
    %v122 = vmax.f32 %v120, 0.0
    %v123 = vadd.f32 %v121, %v65
    %v124 = vadd.f32 %v122, %v74
    %v125 = vsel %vm47, %v83, %v85
    %v126 = vsel %vm48, %v84, %v86
    %v127 = vmin.f32 %v125, 0.999999
    %v128 = vmin.f32 %v126, 0.999999
    %v129 = vsub.f32 1.0, %v127
    %v130 = vsub.f32 1.0, %v128
    %v131 = vmul.f32 %v129, %v129
    %v132 = vmul.f32 %v130, %v130
    %v133 = vmul.f32 %v131, %v123
    %v134 = vmul.f32 %v132, %v124
    %v135 = vadd.f32 %v115, %v116
    %v136 = vrot.slane %v135, 4
    %v137 = vadd.f32 %v135, %v136
    %v138 = vrot.slane %v137, 2
    %v139 = vadd.f32 %v137, %v138
    %v140 = vrot.slane %v139, 1
    %v141 = vadd.f32 %v139, %v140
    %142 = vst [vmem:[#allocation7] sm:$0x1] %v141
    %v143 = vadd.f32 %v133, %v134
    %v144 = vrot.slane %v143, 4
    %v145 = vadd.f32 %v143, %v144
    %v146 = vrot.slane %v145, 2
    %v147 = vadd.f32 %v145, %v146
    %v148 = vrot.slane %v147, 1
    %v149 = vadd.f32 %v147, %v148
    %150 = vst [vmem:[#allocation8] sm:$0x1] %v149
    // Predicated region
    $region18: #{tpu_custom_call.1} parent=1 // pred_check
      _
    $region19: #{tpu_custom_call.1} parent=1 // pred_check_branch
      %152 = sbr.rel (0) target = $region21
    $region20: #{tpu_custom_call.1} parent=1 // pred_region
      %s154 = ssub.s32 16, 16
      %155 = vsyncadd [#allocation4], %s154
      %s157 = sshll.u32 [#allocation7], 4
      %s158 = int_to_ptr.vmem [resolvable:$true] %s157
      %160 = dma.vmem_to_hbm [thread:$0]  %s158, 16, %s2, [#allocation4]
    $region21: #{tpu_custom_call.1} parent=1 // pred_fallthru
      _
    // Predicated region
    $region22: #{tpu_custom_call.1} parent=1 // pred_check
      _
    $region23: #{tpu_custom_call.1} parent=1 // pred_check_branch
      %162 = sbr.rel (0) target = $region25
    $region24: #{tpu_custom_call.1} parent=1 // pred_region
      %s164 = ssub.s32 16, 16
      %165 = vsyncadd [#allocation9], %s164
      %s167 = sshll.u32 [#allocation8], 4
      %s168 = int_to_ptr.vmem [resolvable:$true] %s167
      %170 = dma.vmem_to_hbm [thread:$0]  %s168, 16, %s3, [#allocation9]
    $region25: #{tpu_custom_call.1} parent=1 // pred_fallthru
      _
    // Predicated region
    $region26: #{tpu_custom_call.1} parent=1 // pred_check
      _
    $region27: #{tpu_custom_call.1} parent=1 // pred_check_branch
      %172 = sbr.rel (0) target = $region29
    $region28: #{tpu_custom_call.1} parent=1 // pred_region
      %173 = dma.done [#allocation4], 16
    $region29: #{tpu_custom_call.1} parent=1 // pred_fallthru
      _
    // Predicated region
    $region30: #{tpu_custom_call.1} parent=1 // pred_check
      _
    $region31: #{tpu_custom_call.1} parent=1 // pred_check_branch
      %175 = sbr.rel (0) target = $region33
    $region32: #{tpu_custom_call.1} parent=1 // pred_region
      %176 = dma.done [#allocation9], 16
    $region33: #{tpu_custom_call.1} parent=1 // pred_fallthru
      _
    %177 = vsyncpa [#allocation3], 1
    %178 = vsyncpa [#allocation6], 1
    %179 = vsyncpa [#allocation4], 1
    %180 = vsyncpa [#allocation9], 1

</llo_original>
